<compile_context>
chip_gen: v7x
topology: tpu7x:2x2x1
jax: 0.10.0
libtpu: 0.0.40
codegen_flags: <defaults>
</compile_context>

<pallas_src>
import functools
import math

import jax
import jax.numpy as jnp
from jax.experimental import pallas as pl
from jax.experimental.pallas import tpu as pltpu


def _round_up(a, b):
    return (a + b - 1) // b * b


def _vmem_capacity_bytes():
    """Best-effort physical VMEM capacity; conservative fallback."""
    try:
        info = pltpu.get_tpu_info()
        cap = getattr(info, "vmem_capacity_bytes", None)
        if cap:
            return int(cap)
    except Exception:
        pass
    try:
        kind = jax.devices()[0].device_kind.lower()
        if "v7" in kind:
            return 64 * 1024 * 1024
        return 128 * 1024 * 1024
    except Exception:
        return 64 * 1024 * 1024


def _weight_spec(shape, index_map, multibuffer):
    """Weight BlockSpec; 3-deep buffered when the inner dim is chunked."""
    if multibuffer:
        try:
            return pl.BlockSpec(shape, index_map, pipeline_mode=pl.Buffered(3))
        except TypeError:
            pass  # older BlockSpec without pipeline_mode -> plain double-buffer
    return pl.BlockSpec(shape, index_map)


def _vmem_estimate(tm, ti, D, I, x_itemsize, c_itemsize, p_itemsize, w_buffers):
    """VMEM bytes needed, including the f32 GELU intermediate and cast temp."""
    est = 0
    est += 2 * tm * D * x_itemsize            # x tile (double-buffered)
    est += 2 * tm * D * x_itemsize            # output tile (double-buffered)
    est += w_buffers * D * ti * c_itemsize    # W1 chunk
    est += w_buffers * ti * D * c_itemsize    # W2 chunk
    est += w_buffers * ti * p_itemsize        # b1 chunk
    est += 2 * 3 * D * p_itemsize             # gamma, beta, b2
    est += tm * D * c_itemsize                # cached normalized-x scratch
    est += tm * D * 4                         # f32 output accumulator
    est += tm * ti * 4                        # f32 Linear1/GELU intermediate
    est += tm * ti * c_itemsize               # GELU output cast for matmul2
    return est


def ffn_kernel(x_ref, g_ref, beta_ref, w1_ref, b1_ref, w2_ref, b2_ref, o_ref,
               xn_ref, acc_ref, *, approximate_gelu=False):
    j = pl.program_id(1)

    # --- LayerNorm (f32 stats, eps=1e-5, biased variance — matches PyTorch) ---
    # Computed once per row tile; cached in VMEM in the MXU compute dtype.
    @pl.when(j == 0)
    def _():
        x = x_ref[...].astype(jnp.float32)
        mu = jnp.mean(x, axis=-1, keepdims=True)
        xc = x - mu
        var = jnp.mean(xc * xc, axis=-1, keepdims=True)
        xn = xc * jax.lax.rsqrt(var + 1e-5)
        xn = xn * g_ref[...].astype(jnp.float32) + beta_ref[...].astype(jnp.float32)
        xn_ref[...] = xn.astype(xn_ref.dtype)
        acc_ref[...] = jnp.zeros_like(acc_ref)

    # --- Linear1 chunk: (TM, D) @ (D, TI) + b1_chunk, f32 accumulation ---
    h = jnp.dot(xn_ref[...], w1_ref[...], preferred_element_type=jnp.float32)
    h = h + b1_ref[...].astype(jnp.float32)

    # --- GELU: exact erf (nn.GELU default) or tanh approx (EUP path) ---
    if approximate_gelu:
        h = jax.nn.gelu(h, approximate=True)
    else:
        h = 0.5 * h * (1.0 + jax.lax.erf(h * (1.0 / math.sqrt(2.0))))

    # --- Linear2 chunk: accumulate (TM, TI) @ (TI, D) into f32 scratch ---
    acc_ref[...] += jnp.dot(h.astype(w2_ref.dtype), w2_ref[...],
                            preferred_element_type=jnp.float32)

    # --- finalize: add b2 and store the lane-dense output tile ---
    @pl.when(j == pl.num_programs(1) - 1)
    def _():
        out = acc_ref[...] + b2_ref[...].astype(jnp.float32)
        o_ref[...] = out.astype(o_ref.dtype)


def ffn_forward(x, gamma, beta, w1, b1, w2, b2, *, tile_rows=512, tile_inner=None,
                compute_dtype=None, approximate_gelu=False):
    """x: [B, S, D]; gamma/beta: [D]; w1: [D, I]; b1: [I]; w2: [I, D]; b2: [D]."""
    B, S, D = x.shape
    I = w1.shape[1]
    rows = B * S

    if compute_dtype is None:
        compute_dtype = x.dtype          # pass jnp.bfloat16 on v6e/v7x for full MXU rate
    compute_dtype = jnp.dtype(compute_dtype)
    x_itemsize = jnp.dtype(x.dtype).itemsize
    c_itemsize = compute_dtype.itemsize
    p_itemsize = jnp.dtype(gamma.dtype).itemsize

    # --- generation-aware VMEM budget ---
    cap = _vmem_capacity_bytes()
    if cap <= 64 * 1024 * 1024:
        limit_cap = 56 * 1024 * 1024     # leave headroom on v7x's 64 MiB
    else:
        limit_cap = 100 * 1024 * 1024    # v5e/v6e 128 MiB parts: allow big tiles
    budget = limit_cap - (4 * 1024 * 1024)

    # --- row tile: multiple of the sublane count; keep >= 2 tiles for the 2 TCs of v7x ---
    sub = 16 if x_itemsize == 2 else 8
    tm = max(sub, min(int(tile_rows), _round_up(rows, sub)))
    tm = _round_up(tm, sub)
    while _round_up(rows, tm) // tm < 2 and tm > sub:
        tm = max(sub, _round_up(tm // 2, sub))

    def fits(tm_, ti_, nbuf):
        return _vmem_estimate(tm_, ti_, D, I, x_itemsize, c_itemsize,
                              p_itemsize, nbuf) <= budget

    # --- inner-dim tile: prefer ti == I (weights fully VMEM-resident) ---
    if (tile_inner is not None and I % int(tile_inner) == 0
            and (int(tile_inner) == I or int(tile_inner) % 128 == 0)):
        ti = int(tile_inner)
    else:
        cands = [I] + [c for c in (4096, 2048, 1024, 512, 256, 128)
                       if c < I and I % c == 0]
        ti = None
        for c in cands:
            if fits(tm, c, 2 if c == I else 3):
                ti = c
                break
        if ti is None:
            ti = cands[-1]

    n_inner = I // ti
    multibuffer_w = n_inner > 1
    nbuf = 3 if multibuffer_w else 2

    # If still over budget, shrink the row tile instead of the weight chunk.
    while not fits(tm, ti, nbuf) and tm > max(sub, 128):
        tm = max(sub, _round_up(tm // 2, sub))

    rows_p = _round_up(rows, tm)
    grid = (rows_p // tm, n_inner)

    est = _vmem_estimate(tm, ti, D, I, x_itemsize, c_itemsize, p_itemsize, nbuf)
    vmem_limit = int(min(max(est * 1.5 + (4 << 20), 32 * 1024 * 1024), limit_cap))

    # --- operand prep ---
    x2 = x.reshape(rows, D)
    if rows_p != rows:
        x2 = jnp.pad(x2, ((0, rows_p - rows), (0, 0)))
    g2 = gamma.reshape(1, D)
    be2 = beta.reshape(1, D)
    b1_2 = b1.reshape(1, I)
    b2_2 = b2.reshape(1, D)
    # Pre-cast weights once (halves weight DMA and feeds the MXU natively).
    w1c = w1.astype(compute_dtype)
    w2c = w2.astype(compute_dtype)

    kernel = functools.partial(ffn_kernel, approximate_gelu=approximate_gelu)

    out2 = pl.pallas_call(
        kernel,
        out_shape=jax.ShapeDtypeStruct((rows_p, D), x.dtype),
        grid_spec=pltpu.PrefetchScalarGridSpec(
            num_scalar_prefetch=0,
            grid=grid,
            in_specs=[
                pl.BlockSpec((tm, D), lambda i, j: (i, 0)),            # x rows
                pl.BlockSpec((1, D), lambda i, j: (0, 0)),             # gamma
                pl.BlockSpec((1, D), lambda i, j: (0, 0)),             # beta
                _weight_spec((D, ti), lambda i, j: (0, j), multibuffer_w),  # W1 chunk
                pl.BlockSpec((1, ti), lambda i, j: (0, j)),            # b1 chunk
                _weight_spec((ti, D), lambda i, j: (j, 0), multibuffer_w),  # W2 chunk
                pl.BlockSpec((1, D), lambda i, j: (0, 0)),             # b2
            ],
            out_specs=pl.BlockSpec((tm, D), lambda i, j: (i, 0)),
            scratch_shapes=[
                pltpu.VMEM((tm, D), compute_dtype),   # cached normalized x tile
                pltpu.VMEM((tm, D), jnp.float32),     # f32 output accumulator
            ],
        ),
        compiler_params=pltpu.CompilerParams(
            dimension_semantics=("parallel", "arbitrary"),
            vmem_limit_bytes=vmem_limit),
    )(x2, g2, be2, w1c, b1_2, w2c, b2_2)

    if rows_p != rows:
        out2 = out2[:rows]
    return out2.reshape(B, S, D)


def init_params(key, dim, mult=4, dtype=jnp.float32):
    """Deterministic synthetic parameters matching nn.Linear/nn.LayerNorm shapes."""
    inner = int(dim * mult)
    k1, k2, k3, k4 = jax.random.split(key, 4)
    # PyTorch nn.Linear default init: U(-1/sqrt(fan_in), 1/sqrt(fan_in))
    lim1 = 1.0 / math.sqrt(dim)
    lim2 = 1.0 / math.sqrt(inner)
    w1 = jax.random.uniform(k1, (dim, inner), dtype, -lim1, lim1)   # stored [in, out]
    b1 = jax.random.uniform(k2, (inner,), dtype, -lim1, lim1)
    w2 = jax.random.uniform(k3, (inner, dim), dtype, -lim2, lim2)
    b2 = jax.random.uniform(k4, (dim,), dtype, -lim2, lim2)
    gamma = jnp.ones((dim,), dtype)   # LayerNorm weight
    beta = jnp.zeros((dim,), dtype)   # LayerNorm bias
    return gamma, beta, w1, b1, w2, b2


def ffn_reference(x, gamma, beta, w1, b1, w2, b2):
    """Pure-JAX reference for correctness checking."""
    xf = x.astype(jnp.float32)
    mu = jnp.mean(xf, axis=-1, keepdims=True)
    var = jnp.mean((xf - mu) ** 2, axis=-1, keepdims=True)
    xn = (xf - mu) / jnp.sqrt(var + 1e-5) * gamma.astype(jnp.float32) + beta.astype(jnp.float32)
    h = xn @ w1.astype(jnp.float32) + b1.astype(jnp.float32)
    h = 0.5 * h * (1.0 + jax.lax.erf(h / jnp.sqrt(2.0)))
    return (h @ w2.astype(jnp.float32) + b2.astype(jnp.float32)).astype(x.dtype)


if __name__ == "__main__":
    # Small, lane-aligned test shapes: D=128 (one full lane), I = 4*D = 512.
    B, S, dim, mult = 2, 8, 128, 4

    key = jax.random.PRNGKey(0)
    kx, kp = jax.random.split(key)
    x = jax.random.normal(kx, (B, S, dim), jnp.float32)
    gamma, beta, w1, b1, w2, b2 = init_params(kp, dim, mult)

    ref = ffn_reference(x, gamma, beta, w1, b1, w2, b2)

    # 1) default f32 path; weights are fully VMEM-resident (single inner chunk).
    out = ffn_forward(x, gamma, beta, w1, b1, w2, b2)
    out = jax.block_until_ready(out)
    assert out.shape == (B, S, dim)
    assert jnp.allclose(out, ref, atol=1e-4, rtol=1e-4), "resident-weights path mismatch"

    # 2) forced inner-dim chunking (exercises the buffered weight-streaming path).
    out_c = ffn_forward(x, gamma, beta, w1, b1, w2, b2, tile_inner=256)
    out_c = jax.block_until_ready(out_c)
    assert jnp.allclose(out_c, ref, atol=1e-4, rtol=1e-4), "chunked-weights path mismatch"

    # 3) bf16 MXU feed (recommended on v6e/v7x); f32 accumulation, looser tolerance.
    out_bf = ffn_forward(x, gamma, beta, w1, b1, w2, b2, compute_dtype=jnp.bfloat16)
    out_bf = jax.block_until_ready(out_bf)
    assert jnp.allclose(out_bf, ref, atol=5e-2, rtol=5e-2), "bf16 compute path mismatch"

    print("KERNEL_OK")
</pallas_src>

<mosaic_0001>
module attributes {stable_mosaic.version = 11 : i64} {
  func.func @ffn_kernel(%arg0: i32, %arg1: i32, %arg2: memref<8x128xf32, #tpu.memory_space<vmem>>, %arg3: memref<1x128xf32, #tpu.memory_space<vmem>>, %arg4: memref<1x128xf32, #tpu.memory_space<vmem>>, %arg5: memref<128x512xf32, #tpu.memory_space<vmem>>, %arg6: memref<1x512xf32, #tpu.memory_space<vmem>>, %arg7: memref<512x128xf32, #tpu.memory_space<vmem>>, %arg8: memref<1x128xf32, #tpu.memory_space<vmem>>, %arg9: memref<8x128xf32, #tpu.memory_space<vmem>>, %arg10: memref<8x128xf32, #tpu.memory_space<vmem>>, %arg11: memref<8x128xf32, #tpu.memory_space<vmem>>) attributes {dimension_semantics = [#tpu.dimension_semantics<parallel>, #tpu.dimension_semantics<arbitrary>], iteration_bounds = array<i64: 2, 1>, scalar_prefetch = 0 : i64, scratch_operands = 2 : i64, tpu.core_type = #tpu.core_type<tc>, window_params = [{transform_indices = @transform_0, window_bounds = array<i64: 8, 128>}, {pipeline_mode = #tpu.pipeline_mode<synchronous>, transform_indices = @transform_1, window_bounds = array<i64: 1, 128>}, {pipeline_mode = #tpu.pipeline_mode<synchronous>, transform_indices = @transform_2, window_bounds = array<i64: 1, 128>}, {transform_indices = @transform_3, window_bounds = array<i64: 128, 512>}, {transform_indices = @transform_4, window_bounds = array<i64: 1, 512>}, {transform_indices = @transform_5, window_bounds = array<i64: 512, 128>}, {pipeline_mode = #tpu.pipeline_mode<synchronous>, transform_indices = @transform_6, window_bounds = array<i64: 1, 128>}, {transform_indices = @transform_7, window_bounds = array<i64: 8, 128>}]} {
    %c0_i32 = arith.constant 0 : i32
    %0 = arith.cmpi eq, %arg1, %c0_i32 : i32
    %1 = arith.extui %0 : i1 to i32
    %c0_i32_0 = arith.constant 0 : i32
    %2 = arith.cmpi ne, %1, %c0_i32_0 : i32
    scf.if %2 {
      %c0_18 = arith.constant 0 : index
      %c0_19 = arith.constant 0 : index
      %25 = vector.load %arg2[%c0_18, %c0_19] : memref<8x128xf32, #tpu.memory_space<vmem>>, vector<8x128xf32>
      %cst_20 = arith.constant dense<0.000000e+00> : vector<8xf32>
      %26 = vector.multi_reduction <add>, %25, %cst_20 [1] : vector<8x128xf32> to vector<8xf32>
      %27 = vector.shape_cast %26 : vector<8xf32> to vector<8x1xf32>
      %cst_21 = arith.constant 1.280000e+02 : f32
      %28 = vector.broadcast %cst_21 : f32 to vector<8x1xf32>
      %29 = arith.divf %27, %28 : vector<8x1xf32>
      %30 = vector.broadcast %29 : vector<8x1xf32> to vector<8x128xf32>
      %31 = arith.subf %25, %30 : vector<8x128xf32>
      %32 = arith.mulf %31, %31 : vector<8x128xf32>
      %cst_22 = arith.constant dense<0.000000e+00> : vector<8xf32>
      %33 = vector.multi_reduction <add>, %32, %cst_22 [1] : vector<8x128xf32> to vector<8xf32>
      %34 = vector.shape_cast %33 : vector<8xf32> to vector<8x1xf32>
      %cst_23 = arith.constant 1.280000e+02 : f32
      %35 = vector.broadcast %cst_23 : f32 to vector<8x1xf32>
      %36 = arith.divf %34, %35 : vector<8x1xf32>
      %cst_24 = arith.constant 9.99999974E-6 : f32
      %37 = vector.broadcast %cst_24 : f32 to vector<8x1xf32>
      %38 = arith.addf %36, %37 : vector<8x1xf32>
      %39 = math.rsqrt %38 : vector<8x1xf32>
      %40 = vector.broadcast %39 : vector<8x1xf32> to vector<8x128xf32>
      %41 = arith.mulf %31, %40 : vector<8x128xf32>
      %c0_25 = arith.constant 0 : index
      %c0_26 = arith.constant 0 : index
      %42 = vector.load %arg3[%c0_25, %c0_26] : memref<1x128xf32, #tpu.memory_space<vmem>>, vector<1x128xf32>
      %43 = vector.broadcast %42 : vector<1x128xf32> to vector<8x128xf32>
      %44 = arith.mulf %41, %43 : vector<8x128xf32>
      %c0_27 = arith.constant 0 : index
      %c0_28 = arith.constant 0 : index
      %45 = vector.load %arg4[%c0_27, %c0_28] : memref<1x128xf32, #tpu.memory_space<vmem>>, vector<1x128xf32>
      %46 = vector.broadcast %45 : vector<1x128xf32> to vector<8x128xf32>
      %47 = arith.addf %44, %46 : vector<8x128xf32>
      %c0_29 = arith.constant 0 : index
      %c0_30 = arith.constant 0 : index
      %48 = vector.load %arg10[%c0_29, %c0_30] : memref<8x128xf32, #tpu.memory_space<vmem>>, vector<8x128xf32>
      tpu.vector_store %arg10[%c0_29, %c0_30], %47 {strides = array<i32>} : memref<8x128xf32, #tpu.memory_space<vmem>>, vector<8x128xf32>,
      %cst_31 = arith.constant 0.000000e+00 : f32
      %49 = vector.broadcast %cst_31 : f32 to vector<8x128xf32>
      %c0_32 = arith.constant 0 : index
      %c0_33 = arith.constant 0 : index
      %50 = vector.load %arg11[%c0_32, %c0_33] : memref<8x128xf32, #tpu.memory_space<vmem>>, vector<8x128xf32>
      tpu.vector_store %arg11[%c0_32, %c0_33], %49 {strides = array<i32>} : memref<8x128xf32, #tpu.memory_space<vmem>>, vector<8x128xf32>,
    } else {
    }
    %c0 = arith.constant 0 : index
    %c0_1 = arith.constant 0 : index
    %3 = vector.load %arg10[%c0, %c0_1] : memref<8x128xf32, #tpu.memory_space<vmem>>, vector<8x128xf32>
    %c0_2 = arith.constant 0 : index
    %c0_3 = arith.constant 0 : index
    %4 = vector.load %arg5[%c0_2, %c0_3] : memref<128x512xf32, #tpu.memory_space<vmem>>, vector<128x512xf32>
    %cst = arith.constant dense<0.000000e+00> : vector<8x512xf32>
    %5 = tpu.matmul %3, %4, %cst {dimension_numbers = #tpu.dot_dimension_numbers<[1], [0], [0], [1], [0, 0, 1, 1], [], []>} : vector<8x128xf32>, vector<128x512xf32>, vector<8x512xf32> -> vector<8x512xf32>
    %c0_4 = arith.constant 0 : index
    %c0_5 = arith.constant 0 : index
    %6 = vector.load %arg6[%c0_4, %c0_5] : memref<1x512xf32, #tpu.memory_space<vmem>>, vector<1x512xf32>
    %7 = vector.broadcast %6 : vector<1x512xf32> to vector<8x512xf32>
    %8 = arith.addf %5, %7 : vector<8x512xf32>
    %cst_6 = arith.constant 5.000000e-01 : f32
    %9 = vector.broadcast %cst_6 : f32 to vector<8x512xf32>
    %10 = arith.mulf %9, %8 : vector<8x512xf32>
    %cst_7 = arith.constant 0.707106769 : f32
    %11 = vector.broadcast %cst_7 : f32 to vector<8x512xf32>
    %12 = arith.mulf %8, %11 : vector<8x512xf32>
    %13 = math.erf %12 : vector<8x512xf32>
    %cst_8 = arith.constant 1.000000e+00 : f32
    %14 = vector.broadcast %cst_8 : f32 to vector<8x512xf32>
    %15 = arith.addf %14, %13 : vector<8x512xf32>
    %16 = arith.mulf %10, %15 : vector<8x512xf32>
    %c0_9 = arith.constant 0 : index
    %c0_10 = arith.constant 0 : index
    %17 = vector.load %arg11[%c0_9, %c0_10] : memref<8x128xf32, #tpu.memory_space<vmem>>, vector<8x128xf32>
    %c0_11 = arith.constant 0 : index
    %c0_12 = arith.constant 0 : index
    %18 = vector.load %arg7[%c0_11, %c0_12] : memref<512x128xf32, #tpu.memory_space<vmem>>, vector<512x128xf32>
    %cst_13 = arith.constant dense<0.000000e+00> : vector<8x128xf32>
    %19 = tpu.matmul %16, %18, %cst_13 {dimension_numbers = #tpu.dot_dimension_numbers<[1], [0], [0], [1], [0, 0, 1, 1], [], []>} : vector<8x512xf32>, vector<512x128xf32>, vector<8x128xf32> -> vector<8x128xf32>
    %20 = arith.addf %17, %19 : vector<8x128xf32>
    %c0_14 = arith.constant 0 : index
    %c0_15 = arith.constant 0 : index
    %21 = vector.load %arg11[%c0_14, %c0_15] : memref<8x128xf32, #tpu.memory_space<vmem>>, vector<8x128xf32>
    tpu.vector_store %arg11[%c0_14, %c0_15], %20 {strides = array<i32>} : memref<8x128xf32, #tpu.memory_space<vmem>>, vector<8x128xf32>,
    %c0_i32_16 = arith.constant 0 : i32
    %22 = arith.cmpi eq, %arg1, %c0_i32_16 : i32
    %23 = arith.extui %22 : i1 to i32
    %c0_i32_17 = arith.constant 0 : i32
    %24 = arith.cmpi ne, %23, %c0_i32_17 : i32
    scf.if %24 {
      %c0_18 = arith.constant 0 : index
      %c0_19 = arith.constant 0 : index
      %25 = vector.load %arg11[%c0_18, %c0_19] : memref<8x128xf32, #tpu.memory_space<vmem>>, vector<8x128xf32>
      %c0_20 = arith.constant 0 : index
      %c0_21 = arith.constant 0 : index
      %26 = vector.load %arg8[%c0_20, %c0_21] : memref<1x128xf32, #tpu.memory_space<vmem>>, vector<1x128xf32>
      %27 = vector.broadcast %26 : vector<1x128xf32> to vector<8x128xf32>
      %28 = arith.addf %25, %27 : vector<8x128xf32>
      %c0_22 = arith.constant 0 : index
      %c0_23 = arith.constant 0 : index
      %29 = vector.load %arg9[%c0_22, %c0_23] : memref<8x128xf32, #tpu.memory_space<vmem>>, vector<8x128xf32>
      tpu.vector_store %arg9[%c0_22, %c0_23], %28 {strides = array<i32>} : memref<8x128xf32, #tpu.memory_space<vmem>>, vector<8x128xf32>,
    } else {
    }
    return
  }
  func.func @transform_0(%arg0: i32, %arg1: i32) -> (i32, i32) {
    %c0_i32 = arith.constant 0 : i32
    %c0_i32_0 = arith.constant 0 : i32
    return %arg0, %c0_i32 : i32, i32
  }
  func.func @transform_1(%arg0: i32, %arg1: i32) -> (i32, i32) {
    %c0_i32 = arith.constant 0 : i32
    %c0_i32_0 = arith.constant 0 : i32
    %c0_i32_1 = arith.constant 0 : i32
    return %c0_i32, %c0_i32_0 : i32, i32
  }
  func.func @transform_2(%arg0: i32, %arg1: i32) -> (i32, i32) {
    %c0_i32 = arith.constant 0 : i32
    %c0_i32_0 = arith.constant 0 : i32
    %c0_i32_1 = arith.constant 0 : i32
    return %c0_i32, %c0_i32_0 : i32, i32
  }
  func.func @transform_3(%arg0: i32, %arg1: i32) -> (i32, i32) {
    %c0_i32 = arith.constant 0 : i32
    %c0_i32_0 = arith.constant 0 : i32
    return %c0_i32, %arg1 : i32, i32
  }
  func.func @transform_4(%arg0: i32, %arg1: i32) -> (i32, i32) {
    %c0_i32 = arith.constant 0 : i32
    %c0_i32_0 = arith.constant 0 : i32
    return %c0_i32, %arg1 : i32, i32
  }
  func.func @transform_5(%arg0: i32, %arg1: i32) -> (i32, i32) {
    %c0_i32 = arith.constant 0 : i32
    %c0_i32_0 = arith.constant 0 : i32
    return %arg1, %c0_i32 : i32, i32
  }
  func.func @transform_6(%arg0: i32, %arg1: i32) -> (i32, i32) {
    %c0_i32 = arith.constant 0 : i32
    %c0_i32_0 = arith.constant 0 : i32
    %c0_i32_1 = arith.constant 0 : i32
    return %c0_i32, %c0_i32_0 : i32, i32
  }
  func.func @transform_7(%arg0: i32, %arg1: i32) -> (i32, i32) {
    %c0_i32 = arith.constant 0 : i32
    %c0_i32_0 = arith.constant 0 : i32
    return %arg0, %c0_i32 : i32, i32
  }
}

</mosaic_0001>

<llo_original>
// kernel: tpu_custom_call.1
$region0: #{tpu_custom_call.1}
  #allocation0 [shape = 'u32[]', space=smem, size = 0x4, offset = 0x4, fixed_abs, tag = 'smem constant byte address 0x4 - core index']
  #allocation1 [shape = 'u32[144,128]{1,0:T(1,128)}', space=vmem, size = 0x12000, scoped, tag = 'internal scratch']
  #allocation2 [shape = 'f32[8,128]{1,0:T(8,128)}', space=vmem, size = 0x1000, scoped, tag = 'scratch operand']
  #allocation3 [shape = 'f32[8,128]{1,0:T(8,128)}', space=vmem, size = 0x1000, scoped, tag = 'scratch operand']
  %s0 = inlined_call_operand.hbm [shape: f32[16,128], index: 0, kind: input, shape index: {}]
  %s1 = inlined_call_operand.vmem [shape: f32[1,128], index: 1, kind: input, shape index: {}]
  %s2 = inlined_call_operand.vmem [shape: f32[1,128], index: 2, kind: input, shape index: {}]
  %s3 = inlined_call_operand.hbm [shape: f32[128,512], index: 3, kind: input, shape index: {}]
  %s4 = inlined_call_operand.vmem [shape: f32[1,512], index: 4, kind: input, shape index: {}]
  %s5 = inlined_call_operand.hbm [shape: f32[512,128], index: 5, kind: input, shape index: {}]
  %s6 = inlined_call_operand.vmem [shape: f32[1,128], index: 6, kind: input, shape index: {}]
  %s7 = inlined_call_operand.hbm [shape: f32[16,128], index: 7, kind: output, shape index: {}]
  %s8 = sld [smem:[#allocation0]]
  $region81: #{tpu_custom_call.1} parent=0
    _
  %s10 = ssub.s32 1, %s8
  %s11 = scalar_select 0, %s10, %s8
  $region1: #{tpu_custom_call.1} parent=0
    #allocation4 [shape = 'u8[8192]{0}', space=vmem, size = 0x2000, scoped, tag = 'input window, operand 0']
    #allocation5 [shape = 's32[2]{0}', space=sflag, size = 0x8, scoped, tag = 'scoped memory for tpu_custom_call.1']
    #allocation6 [shape = 's32[2]{0}', space=sflag, size = 0x8, scoped, tag = 'scoped memory for tpu_custom_call.1']
    #allocation7 [shape = 'u8[262144]{0}', space=vmem, size = 0x40000, scoped, tag = 'input window, operand 3, single buffered']
    #allocation8 [shape = 's32[1]{0}', space=sflag, size = 0x4, scoped, tag = 'scoped memory for tpu_custom_call.1']
    #allocation9 [shape = 'u8[262144]{0}', space=vmem, size = 0x40000, scoped, tag = 'input window, operand 5, single buffered']
    #allocation10 [shape = 'u8[8192]{0}', space=vmem, size = 0x2000, scoped, tag = 'output window, operand 0']
    %12 = vsyncpa [#allocation5], 0
    %s13 = scalar_lea.sflag [#allocation5], 1
    %14 = vsyncpa %s13, 0
    %15 = vsyncpa [#allocation8], 0
    %16 = vsyncpa [#allocation6], 0
    %s17 = scalar_lea.sflag [#allocation6], 1
    %18 = vsyncpa %s17, 0
    loop: start=0, step=1, limit=4
    $region2: #{tpu_custom_call.1} parent=1 // loop_pre_header
      _
    $region3: #{tpu_custom_call.1} parent=1 // loop_header
      %s20 = sphi 0, %s24
      %p21 = scmp.ge.s32.totalorder %s20, 4
      %s27 = sphi 0, %s39
      %s28 = sphi 0, %s35
      %s29 = sphi 0, %s27
      %s30 = sphi 0, %s28
      %s31 = sphi 0, %s29
      %s32 = sphi 0, %s30
      %s42 = sphi 0, %s44
      %s45 = sphi 0, %s42
      %s46 = sphi 0, %s45
      %s62 = sphi 0, %s46
      %s66 = sphi 0, %s66
      %s68 = sphi 0, %s66
      %s69 = sphi 0, %s68
      %s83 = sphi 0, %s69
      %s87 = sphi 0, %s87
      %s89 = sphi 0, %s87
      %s90 = sphi 0, %s89
      %s104 = sphi 0, %s90
      %s110 = sphi 0, %s112
      %s113 = sphi 0, %s110
      %s114 = sphi 0, %s113
      %s130 = sphi 0, %s114
      %s136 = sphi 0, %s138
      %s139 = sphi 0, %s136
      %s140 = sphi 0, %s139
      %s156 = sphi 0, %s140
      %s162 = sphi 0, %s164
      %s165 = sphi 0, %s162
      %s166 = sphi 0, %s165
      %s182 = sphi 0, %s166
      %s186 = sphi 0, %s186
      %s188 = sphi 0, %s186
      %s189 = sphi 0, %s188
      %s203 = sphi 0, %s189
      %s209 = sphi 0, %s211
      %s212 = sphi 0, %s209
      %s213 = sphi 0, %s212
      %s229 = sphi 0, %s213
    $region4: #{tpu_custom_call.1} parent=1 // loop_header_branch
      %23 = sbr.rel (%p21) target = $region8
    $region5: #{tpu_custom_call.1} parent=1 // loop_body
      %s25 = ssub.s32 %s20, 1
      %s26 = ssub.s32 %s20, 2
      %s33 = sadd.s32 1, %s28
      %p34 = scmp.ge.s32.totalorder %s33, 1
      %s35 = scalar_select %p34, 0, %s33
      %s36 = sadd.s32 1, %s27
      %s37 = scalar_select %p34, %s36, %s27
      %p38 = scmp.ge.s32.totalorder %s37, 2
      %s39 = scalar_select %p38, 0, %s37
      %s40 = ssub.s32 %s27, %s39
      %p41 = scmp.eq.s32.totalorder %s40, 0
      %s43 = sadd.s32 %s42, 1
      %s44 = scalar_select %p41, %s42, %s43
      %p47 = pneg %p41
      %p48 = scmp.eq.s32.totalorder %s20, 1
      %p49 = por %p47, %p48
      %p50 = scmp.ne.s32.totalorder %s42, %s45
      %p51 = scmp.eq.s32.totalorder %s20, 0
      %p52 = por %p50, %p51
      %p53 = scmp.ne.s32.totalorder %s42, %s45
      %p54 = scmp.eq.s32.totalorder %s25, 1
      %p55 = por %p53, %p54
      %p56 = scmp.ne.s32.totalorder %s45, %s46
      %p57 = scmp.eq.s32.totalorder %s25, 0
      %p58 = por %p56, %p57
      %p59 = scmp.ne.s32.totalorder %s45, %s46
      %p60 = scmp.eq.s32.totalorder %s26, 1
      %p61 = por %p59, %p60
      %p63 = scmp.ne.s32.totalorder %s46, %s62
      %p64 = scmp.eq.s32.totalorder %s26, 0
      %p65 = por %p63, %p64
      %s67 = sadd.s32 %s66, 1
      %p70 = scmp.eq.s32.totalorder %s20, 1
      %p71 = scmp.ne.s32.totalorder %s66, %s68
      %p72 = scmp.eq.s32.totalorder %s20, 0
      %p73 = por %p71, %p72
      %p74 = scmp.ne.s32.totalorder %s66, %s68
      %p75 = scmp.eq.s32.totalorder %s25, 1
      %p76 = por %p74, %p75
      %p77 = scmp.ne.s32.totalorder %s68, %s69
      %p78 = scmp.eq.s32.totalorder %s25, 0
      %p79 = por %p77, %p78
      %p80 = scmp.ne.s32.totalorder %s68, %s69
      %p81 = scmp.eq.s32.totalorder %s26, 1
      %p82 = por %p80, %p81
      %p84 = scmp.ne.s32.totalorder %s69, %s83
      %p85 = scmp.eq.s32.totalorder %s26, 0
      %p86 = por %p84, %p85
      %s88 = sadd.s32 %s87, 1
      %p91 = scmp.eq.s32.totalorder %s20, 1
      %p92 = scmp.ne.s32.totalorder %s87, %s89
      %p93 = scmp.eq.s32.totalorder %s20, 0
      %p94 = por %p92, %p93
      %p95 = scmp.ne.s32.totalorder %s87, %s89
      %p96 = scmp.eq.s32.totalorder %s25, 1
      %p97 = por %p95, %p96
      %p98 = scmp.ne.s32.totalorder %s89, %s90
      %p99 = scmp.eq.s32.totalorder %s25, 0
      %p100 = por %p98, %p99
      %p101 = scmp.ne.s32.totalorder %s89, %s90
      %p102 = scmp.eq.s32.totalorder %s26, 1
      %p103 = por %p101, %p102
      %p105 = scmp.ne.s32.totalorder %s90, %s104
      %p106 = scmp.eq.s32.totalorder %s26, 0
      %p107 = por %p105, %p106
      %s108 = ssub.s32 %s28, %s35
      %p109 = scmp.eq.s32.totalorder %s108, 0
      %s111 = sadd.s32 %s110, 1
      %s112 = scalar_select %p109, %s110, %s111
      %p115 = pneg %p109
      %p116 = scmp.eq.s32.totalorder %s20, 1
      %p117 = por %p115, %p116
      %p118 = scmp.ne.s32.totalorder %s110, %s113
      %p119 = scmp.eq.s32.totalorder %s20, 0
      %p120 = por %p118, %p119
      %p121 = scmp.ne.s32.totalorder %s110, %s113
      %p122 = scmp.eq.s32.totalorder %s25, 1
      %p123 = por %p121, %p122
      %p124 = scmp.ne.s32.totalorder %s113, %s114
      %p125 = scmp.eq.s32.totalorder %s25, 0
      %p126 = por %p124, %p125
      %p127 = scmp.ne.s32.totalorder %s113, %s114
      %p128 = scmp.eq.s32.totalorder %s26, 1
      %p129 = por %p127, %p128
      %p131 = scmp.ne.s32.totalorder %s114, %s130
      %p132 = scmp.eq.s32.totalorder %s26, 0
      %p133 = por %p131, %p132
      %s134 = ssub.s32 %s28, %s35
      %p135 = scmp.eq.s32.totalorder %s134, 0
      %s137 = sadd.s32 %s136, 1
      %s138 = scalar_select %p135, %s136, %s137
      %p141 = pneg %p135
      %p142 = scmp.eq.s32.totalorder %s20, 1
      %p143 = por %p141, %p142
      %p144 = scmp.ne.s32.totalorder %s136, %s139
      %p145 = scmp.eq.s32.totalorder %s20, 0
      %p146 = por %p144, %p145
      %p147 = scmp.ne.s32.totalorder %s136, %s139
      %p148 = scmp.eq.s32.totalorder %s25, 1
      %p149 = por %p147, %p148
      %p150 = scmp.ne.s32.totalorder %s139, %s140
      %p151 = scmp.eq.s32.totalorder %s25, 0
      %p152 = por %p150, %p151
      %p153 = scmp.ne.s32.totalorder %s139, %s140
      %p154 = scmp.eq.s32.totalorder %s26, 1
      %p155 = por %p153, %p154
      %p157 = scmp.ne.s32.totalorder %s140, %s156
      %p158 = scmp.eq.s32.totalorder %s26, 0
      %p159 = por %p157, %p158
      %s160 = ssub.s32 %s28, %s35
      %p161 = scmp.eq.s32.totalorder %s160, 0
      %s163 = sadd.s32 %s162, 1
      %s164 = scalar_select %p161, %s162, %s163
      %p167 = pneg %p161
      %p168 = scmp.eq.s32.totalorder %s20, 1
      %p169 = por %p167, %p168
      %p170 = scmp.ne.s32.totalorder %s162, %s165
      %p171 = scmp.eq.s32.totalorder %s20, 0
      %p172 = por %p170, %p171
      %p173 = scmp.ne.s32.totalorder %s162, %s165
      %p174 = scmp.eq.s32.totalorder %s25, 1
      %p175 = por %p173, %p174
      %p176 = scmp.ne.s32.totalorder %s165, %s166
      %p177 = scmp.eq.s32.totalorder %s25, 0
      %p178 = por %p176, %p177
      %p179 = scmp.ne.s32.totalorder %s165, %s166
      %p180 = scmp.eq.s32.totalorder %s26, 1
      %p181 = por %p179, %p180
      %p183 = scmp.ne.s32.totalorder %s166, %s182
      %p184 = scmp.eq.s32.totalorder %s26, 0
      %p185 = por %p183, %p184
      %s187 = sadd.s32 %s186, 1
      %p190 = scmp.eq.s32.totalorder %s20, 1
      %p191 = scmp.ne.s32.totalorder %s186, %s188
      %p192 = scmp.eq.s32.totalorder %s20, 0
      %p193 = por %p191, %p192
      %p194 = scmp.ne.s32.totalorder %s186, %s188
      %p195 = scmp.eq.s32.totalorder %s25, 1
      %p196 = por %p194, %p195
      %p197 = scmp.ne.s32.totalorder %s188, %s189
      %p198 = scmp.eq.s32.totalorder %s25, 0
      %p199 = por %p197, %p198
      %p200 = scmp.ne.s32.totalorder %s188, %s189
      %p201 = scmp.eq.s32.totalorder %s26, 1
      %p202 = por %p200, %p201
      %p204 = scmp.ne.s32.totalorder %s189, %s203
      %p205 = scmp.eq.s32.totalorder %s26, 0
      %p206 = por %p204, %p205
      %s207 = ssub.s32 %s27, %s39
      %p208 = scmp.eq.s32.totalorder %s207, 0
      %s210 = sadd.s32 %s209, 1
      %s211 = scalar_select %p208, %s209, %s210
      %p214 = pneg %p208
      %p215 = scmp.eq.s32.totalorder %s20, 1
      %p216 = por %p214, %p215
      %p217 = scmp.ne.s32.totalorder %s209, %s212
      %p218 = scmp.eq.s32.totalorder %s20, 0
      %p219 = por %p217, %p218
      %p220 = scmp.ne.s32.totalorder %s209, %s212
      %p221 = scmp.eq.s32.totalorder %s25, 1
      %p222 = por %p220, %p221
      %p223 = scmp.ne.s32.totalorder %s212, %s213
      %p224 = scmp.eq.s32.totalorder %s25, 0
      %p225 = por %p223, %p224
      %p226 = scmp.ne.s32.totalorder %s212, %s213
      %p227 = scmp.eq.s32.totalorder %s26, 1
      %p228 = por %p226, %p227
      %p230 = scmp.ne.s32.totalorder %s213, %s229
      %p231 = scmp.eq.s32.totalorder %s26, 0
      %p232 = por %p230, %p231
      %p233 = scmp.le.s32.totalorder 1, %s20
      %p234 = scmp.lt.s32.totalorder %s20, 3
      %p235 = pnand %p233, %p234
      %p236 = pneg %p235
      // Predicated region
      $region9: #{tpu_custom_call.1} parent=5 // pred_check
        _
      $region10: #{tpu_custom_call.1} parent=5 // pred_check_branch
        %238 = sbr.rel (%p235) target = $region12
      $region11: #{tpu_custom_call.1} parent=5 // pred_region
        %s239 = ssub.s32 %s20, 1
        // Predicated region
        $region13: #{tpu_custom_call.1} parent=11 // pred_check
          %p240 = pneg %p79
        $region14: #{tpu_custom_call.1} parent=11 // pred_check_branch
          %242 = sbr.rel (%p240) target = $region16
        $region15: #{tpu_custom_call.1} parent=11 // pred_region
          _
        $region16: #{tpu_custom_call.1} parent=11 // pred_fallthru
          _
        // Predicated region
        $region17: #{tpu_custom_call.1} parent=11 // pred_check
          %p243 = pneg %p100
        $region18: #{tpu_custom_call.1} parent=11 // pred_check_branch
          %245 = sbr.rel (%p243) target = $region20
        $region19: #{tpu_custom_call.1} parent=11 // pred_region
          _
        $region20: #{tpu_custom_call.1} parent=11 // pred_fallthru
          _
        // Predicated region
        $region21: #{tpu_custom_call.1} parent=11 // pred_check
          %p246 = pneg %p126
        $region22: #{tpu_custom_call.1} parent=11 // pred_check_branch
          %248 = sbr.rel (%p246) target = $region24
        $region23: #{tpu_custom_call.1} parent=11 // pred_region
          %s249 = smul.u32 4, %s30
          %s251 = ssub.s32 8192, 8192
          %252 = vsyncadd [#allocation8], %s251
          %s253 = smul.addr %s249, 128
          %s254 = scalar_lea.hbm %s3, %s253
          %s255 = sshll.u32 [#allocation7], 4
          %s256 = int_to_ptr.vmem [resolvable:$true] %s255
          %261 = dma.hbm_to_vmem [thread:$0]  %s254, 8192, %s256, [#allocation8], 512, 512, 32
        $region24: #{tpu_custom_call.1} parent=11 // pred_fallthru
          _
        // Predicated region
        $region25: #{tpu_custom_call.1} parent=11 // pred_check
          %p262 = pneg %p152
        $region26: #{tpu_custom_call.1} parent=11 // pred_check_branch
          %264 = sbr.rel (%p262) target = $region28
        $region27: #{tpu_custom_call.1} parent=11 // pred_region
          %s265 = smul.u32 4, %s30
          %p266 = scmp.lt.s32.totalorder %s265, 3
          %s267 = scalar_select %p266, %s265, 3
          %s268 = scalar_lea.vmem %s4, %s267
          %s269 = smul.u32 4, %s30
        $region28: #{tpu_custom_call.1} parent=11 // pred_fallthru
          _
        // Predicated region
        $region29: #{tpu_custom_call.1} parent=11 // pred_check
          %p270 = pneg %p178
        $region30: #{tpu_custom_call.1} parent=11 // pred_check_branch
          %272 = sbr.rel (%p270) target = $region32
        $region31: #{tpu_custom_call.1} parent=11 // pred_region
          %s273 = smul.u32 64, %s30
          %s275 = ssub.s32 8192, 8192
          %276 = vsyncadd [#allocation8], %s275
          %s277 = smul.addr %s273, 128
          %s278 = scalar_lea.hbm %s5, %s277
          %s279 = sshll.u32 [#allocation9], 4
          %s280 = int_to_ptr.vmem [resolvable:$true] %s279
          %285 = dma.hbm_to_vmem [thread:$0]  %s278, 8192, %s280, [#allocation8], 128, 128, 8
        $region32: #{tpu_custom_call.1} parent=11 // pred_fallthru
          _
        // Predicated region
        $region33: #{tpu_custom_call.1} parent=11 // pred_check
          %p286 = pneg %p199
        $region34: #{tpu_custom_call.1} parent=11 // pred_check_branch
          %288 = sbr.rel (%p286) target = $region36
        $region35: #{tpu_custom_call.1} parent=11 // pred_region
          _
        $region36: #{tpu_custom_call.1} parent=11 // pred_fallthru
          _
      $region12: #{tpu_custom_call.1} parent=5 // pred_fallthru
        _
      %p289 = scmp.lt.s32.totalorder %s20, 2
      // Predicated region
      $region37: #{tpu_custom_call.1} parent=5 // pred_check
        %p290 = pneg %p289
      $region38: #{tpu_custom_call.1} parent=5 // pred_check_branch
        %292 = sbr.rel (%p290) target = $region40
      $region39: #{tpu_custom_call.1} parent=5 // pred_region
        // Predicated region
        $region41: #{tpu_custom_call.1} parent=39 // pred_check
          %p293 = pneg %p52
        $region42: #{tpu_custom_call.1} parent=39 // pred_check_branch
          %295 = sbr.rel (%p293) target = $region44
        $region43: #{tpu_custom_call.1} parent=39 // pred_region
          %s296 = sand.u32 %s42, 1
          %s297 = scalar_lea.sflag [#allocation5], %s296
          %s298 = sand.u32 %s42, 1
          %s299 = smul.addr %s298, 8
          %s300 = scalar_lea.vmem [#allocation4], %s299
          %s302 = ssub.s32 128, 128
          %303 = vsyncadd %s297, %s302
          %s304 = smul.addr %s27, 128
          %s305 = scalar_lea.hbm %s0, %s304
          %s307 = sshll.u32 %s300, 4
          %s308 = int_to_ptr.vmem [resolvable:$true] %s307
          %310 = dma.hbm_to_vmem [thread:$0]  %s305, 128, %s308, %s297
        $region44: #{tpu_custom_call.1} parent=39 // pred_fallthru
          _
      $region40: #{tpu_custom_call.1} parent=5 // pred_fallthru
        _
      %p311 = scmp.le.s32.totalorder 1, %s20
      %p312 = scmp.lt.s32.totalorder %s20, 3
      %p313 = pnand %p311, %p312
      %p314 = pneg %p313
      // Predicated region
      $region45: #{tpu_custom_call.1} parent=5 // pred_check
        _
      $region46: #{tpu_custom_call.1} parent=5 // pred_check_branch
        %316 = sbr.rel (%p313) target = $region48
      $region47: #{tpu_custom_call.1} parent=5 // pred_region
        %s317 = ssub.s32 %s20, 1
        %s318 = sand.u32 %s45, 1
        %s319 = scalar_lea.sflag [#allocation5], %s318
        %s320 = sand.u32 %s45, 1
        %s321 = smul.addr %s320, 8
        %s322 = scalar_lea.vmem [#allocation4], %s321
        // Predicated region
        $region49: #{tpu_custom_call.1} parent=47 // pred_check
          %p323 = pneg %p58
        $region50: #{tpu_custom_call.1} parent=47 // pred_check_branch
          %325 = sbr.rel (%p323) target = $region52
        $region51: #{tpu_custom_call.1} parent=47 // pred_region
          %326 = dma.done %s319, 128
        $region52: #{tpu_custom_call.1} parent=47 // pred_fallthru
          _
        // Predicated region
        $region53: #{tpu_custom_call.1} parent=47 // pred_check
          %p327 = pneg %p126
        $region54: #{tpu_custom_call.1} parent=47 // pred_check_branch
          %329 = sbr.rel (%p327) target = $region56
        $region55: #{tpu_custom_call.1} parent=47 // pred_region
          %330 = dma.done [#allocation8], 8192
        $region56: #{tpu_custom_call.1} parent=47 // pred_fallthru
          _
        // Predicated region
        $region57: #{tpu_custom_call.1} parent=47 // pred_check
          %p331 = pneg %p178
        $region58: #{tpu_custom_call.1} parent=47 // pred_check_branch
          %333 = sbr.rel (%p331) target = $region60
        $region59: #{tpu_custom_call.1} parent=47 // pred_region
          %334 = dma.done [#allocation8], 8192
        $region60: #{tpu_custom_call.1} parent=47 // pred_fallthru
          _
        %s335 = sand.u32 %s45, 1
        %s336 = scalar_lea.sflag [#allocation5], %s335
        %s337 = sand.u32 %s45, 1
        %s338 = smul.addr %s337, 8
        %s339 = scalar_lea.vmem [#allocation4], %s338
        %p340 = pneg %p58
        %p341 = pneg %p55
        %p342 = pneg %p79
        %p343 = pneg %p76
        %p344 = pneg %p100
        %p345 = pneg %p97
        %p346 = pneg %p126
        %p347 = pneg %p123
        %s348 = smul.u32 4, %s30
        %p349 = scmp.lt.s32.totalorder %s348, 3
        %s350 = scalar_select %p349, %s348, 3
        %s351 = scalar_lea.vmem %s4, %s350
        %p352 = pneg %p152
        %p353 = pneg %p149
        %p354 = pneg %p178
        %p355 = pneg %p175
        %p356 = pneg %p199
        %p357 = pneg %p196
        %p358 = pneg %p225
        %p359 = pneg %p222
        %s360 = sand.u32 %s212, 1
        %s361 = scalar_lea.sflag [#allocation6], %s360
        %s362 = sand.u32 %s212, 1
        %s363 = smul.addr %s362, 8
        %s364 = scalar_lea.vmem [#allocation10], %s363
        %s365 = smul.u32 4, %s30
        %s366 = smul.u32 4, %s30
        %p367 = scmp.lt.s32.totalorder %s366, 3
        %s368 = scalar_select %p367, %s366, 3
        %s369 = scalar_lea.vmem %s4, %s368
        %s370 = smul.u32 4, %s30
        %s371 = smul.u32 64, %s30
        %p372 = scmp.eq.s32.totalorder %s30, 0
        // Predicated region
        $region61: #{tpu_custom_call.1} parent=47 // pred_check
          %p373 = pneg %p372
        $region62: #{tpu_custom_call.1} parent=47 // pred_check_branch
          %375 = sbr.rel (%p373) target = $region64
        $region63: #{tpu_custom_call.1} parent=47 // pred_region
          %v376 = vld [vmem:[%s322] sm:$0xff]
          %377 = vadd.xlane.f32.xlu0 %v376
          %v378 = vpop.xlane.xlu0 %377
          %v379 = vrcp.pop 128.0
          %v380 = vmul.f32 %v378, %v379
          %v381 = vsub.f32 %v376, %v380
          %v382 = vmul.f32 %v381, %v381
          %383 = vadd.xlane.f32.xlu0 %v382
          %v384 = vpop.xlane.xlu0 %383
          %v385 = vmul.f32 %v384, %v379
          %v386 = vadd.f32 %v385, 1e-05
          %v387 = vrsqrt.pop %v386
          %v388 = vmul.f32 %v381, %v387
          %v389 = vld [vmem:[%s1] sm:$0x1]
          %v391 = vlaneseq
          %v392 = vshrl.u32 %v391, 7
          %v393 = vsub.s32 0, %v392
          %v394 = vrot.slane %v389, %v393
          %v396 = vmul.f32 %v388, %v394
          %v397 = vld [vmem:[%s2] sm:$0x1]
          %v399 = vlaneseq
          %v400 = vshrl.u32 %v399, 7
          %v401 = vsub.s32 0, %v400
          %v402 = vrot.slane %v397, %v401
          %v404 = vadd.f32 %v396, %v402
          %405 = vst [vmem:[#allocation2] sm:$0xff] %v404
          %406 = vst [vmem:[#allocation3] sm:$0xff] 0.0
        $region64: #{tpu_custom_call.1} parent=47 // pred_fallthru
          _
        %v407 = vld [vmem:[#allocation2] sm:$0xff]
        %v408 = vld [vmem:[#allocation7] sm:$0xff]
        %v409 = vld [vmem:[#allocation7 + $0x8] sm:$0xff]
        %v410 = vld [vmem:[#allocation7 + $0x10] sm:$0xff]
        %v411 = vld [vmem:[#allocation7 + $0x18] sm:$0xff]
        %v412 = vld [vmem:[#allocation7 + $0x20] sm:$0xff]
        %v413 = vld [vmem:[#allocation7 + $0x28] sm:$0xff]
        %v414 = vld [vmem:[#allocation7 + $0x30] sm:$0xff]
        %v415 = vld [vmem:[#allocation7 + $0x38] sm:$0xff]
        %v416 = vld [vmem:[#allocation7 + $0x40] sm:$0xff]
        %v417 = vld [vmem:[#allocation7 + $0x48] sm:$0xff]
        %v418 = vld [vmem:[#allocation7 + $0x50] sm:$0xff]
        %v419 = vld [vmem:[#allocation7 + $0x58] sm:$0xff]
        %v420 = vld [vmem:[#allocation7 + $0x60] sm:$0xff]
        %v421 = vld [vmem:[#allocation7 + $0x68] sm:$0xff]
        %v422 = vld [vmem:[#allocation7 + $0x70] sm:$0xff]
        %v423 = vld [vmem:[#allocation7 + $0x78] sm:$0xff]
        %v424 = vld [vmem:[#allocation7 + $0x80] sm:$0xff]
        %v425 = vld [vmem:[#allocation7 + $0x88] sm:$0xff]
        %v426 = vld [vmem:[#allocation7 + $0x90] sm:$0xff]
        %v427 = vld [vmem:[#allocation7 + $0x98] sm:$0xff]
        %v428 = vld [vmem:[#allocation7 + $0xa0] sm:$0xff]
        %v429 = vld [vmem:[#allocation7 + $0xa8] sm:$0xff]
        %v430 = vld [vmem:[#allocation7 + $0xb0] sm:$0xff]
        %v431 = vld [vmem:[#allocation7 + $0xb8] sm:$0xff]
        %v432 = vld [vmem:[#allocation7 + $0xc0] sm:$0xff]
        %v433 = vld [vmem:[#allocation7 + $0xc8] sm:$0xff]
        %v434 = vld [vmem:[#allocation7 + $0xd0] sm:$0xff]
        %v435 = vld [vmem:[#allocation7 + $0xd8] sm:$0xff]
        %v436 = vld [vmem:[#allocation7 + $0xe0] sm:$0xff]
        %v437 = vld [vmem:[#allocation7 + $0xe8] sm:$0xff]
        %v438 = vld [vmem:[#allocation7 + $0xf0] sm:$0xff]
        %v439 = vld [vmem:[#allocation7 + $0xf8] sm:$0xff]
        %v440 = vld [vmem:[#allocation7 + $0x100] sm:$0xff]
        %v441 = vld [vmem:[#allocation7 + $0x108] sm:$0xff]
        %v442 = vld [vmem:[#allocation7 + $0x110] sm:$0xff]
        %v443 = vld [vmem:[#allocation7 + $0x118] sm:$0xff]
        %v444 = vld [vmem:[#allocation7 + $0x120] sm:$0xff]
        %v445 = vld [vmem:[#allocation7 + $0x128] sm:$0xff]
        %v446 = vld [vmem:[#allocation7 + $0x130] sm:$0xff]
        %v447 = vld [vmem:[#allocation7 + $0x138] sm:$0xff]
        %v448 = vld [vmem:[#allocation7 + $0x140] sm:$0xff]
        %v449 = vld [vmem:[#allocation7 + $0x148] sm:$0xff]
        %v450 = vld [vmem:[#allocation7 + $0x150] sm:$0xff]
        %v451 = vld [vmem:[#allocation7 + $0x158] sm:$0xff]
        %v452 = vld [vmem:[#allocation7 + $0x160] sm:$0xff]
        %v453 = vld [vmem:[#allocation7 + $0x168] sm:$0xff]
        %v454 = vld [vmem:[#allocation7 + $0x170] sm:$0xff]
        %v455 = vld [vmem:[#allocation7 + $0x178] sm:$0xff]
        %v456 = vld [vmem:[#allocation7 + $0x180] sm:$0xff]
        %v457 = vld [vmem:[#allocation7 + $0x188] sm:$0xff]
        %v458 = vld [vmem:[#allocation7 + $0x190] sm:$0xff]
        %v459 = vld [vmem:[#allocation7 + $0x198] sm:$0xff]
        %v460 = vld [vmem:[#allocation7 + $0x1a0] sm:$0xff]
        %v461 = vld [vmem:[#allocation7 + $0x1a8] sm:$0xff]
        %v462 = vld [vmem:[#allocation7 + $0x1b0] sm:$0xff]
        %v463 = vld [vmem:[#allocation7 + $0x1b8] sm:$0xff]
        %v464 = vld [vmem:[#allocation7 + $0x1c0] sm:$0xff]
        %v465 = vld [vmem:[#allocation7 + $0x1c8] sm:$0xff]
        %v466 = vld [vmem:[#allocation7 + $0x1d0] sm:$0xff]
        %v467 = vld [vmem:[#allocation7 + $0x1d8] sm:$0xff]
        %v468 = vld [vmem:[#allocation7 + $0x1e0] sm:$0xff]
        %v469 = vld [vmem:[#allocation7 + $0x1e8] sm:$0xff]
        %v470 = vld [vmem:[#allocation7 + $0x1f0] sm:$0xff]
        %v471 = vld [vmem:[#allocation7 + $0x1f8] sm:$0xff]
        %v472 = vld [vmem:[%s369] sm:$0xf]
        %v474 = vlaneseq
        %v475 = vshrl.u32 %v474, 7
        %v476 = vsub.s32 0, %v475
        %v477 = vrot.slane %v472, %v476
        %v478 = vlaneseq
        %v479 = vshrl.u32 %v478, 7
        %v480 = vsub.s32 1, %v479
        %v481 = vrot.slane %v472, %v480
        %v482 = vlaneseq
        %v483 = vshrl.u32 %v482, 7
        %v484 = vsub.s32 2, %v483
        %v485 = vrot.slane %v472, %v484
        %v486 = vlaneseq
        %v487 = vshrl.u32 %v486, 7
        %v488 = vsub.s32 3, %v487
        %v489 = vrot.slane %v472, %v488
        %494 = vmatprep.subr.mxu0 %v409
        %495 = vmatpush1.msra.mxu0 %v408
        %496 = vmatprep.subr.mxu0 %v413
        %497 = vmatpush1.msra.mxu0 %v412
        %498 = vmatprep.subr.mxu0 %v417
        %499 = vmatpush1.msra.mxu0 %v416
        %500 = vmatprep.subr.mxu0 %v421
        %501 = vmatpush1.msra.mxu0 %v420
        %502 = vmatprep.subr.mxu0 %v425
        %503 = vmatpush1.msra.mxu0 %v424
        %504 = vmatprep.subr.mxu0 %v429
        %505 = vmatpush1.msra.mxu0 %v428
        %506 = vmatprep.subr.mxu0 %v433
        %507 = vmatpush1.msra.mxu0 %v432
        %508 = vmatprep.subr.mxu0 %v437
        %509 = vmatpush1.msra.mxu0 %v436
        %510 = vmatprep.subr.mxu0 %v441
        %511 = vmatpush1.msra.mxu0 %v440
        %512 = vmatprep.subr.mxu0 %v445
        %513 = vmatpush1.msra.mxu0 %v444
        %514 = vmatprep.subr.mxu0 %v449
        %515 = vmatpush1.msra.mxu0 %v448
        %516 = vmatprep.subr.mxu0 %v453
        %517 = vmatpush1.msra.mxu0 %v452
        %518 = vmatprep.subr.mxu0 %v457
        %519 = vmatpush1.msra.mxu0 %v456
        %520 = vmatprep.subr.mxu0 %v461
        %521 = vmatpush1.msra.mxu0 %v460
        %522 = vmatprep.subr.mxu0 %v465
        %523 = vmatpush1.msra.mxu0 %v464
        %524 = vmatprep.subr.mxu0 %v469
        %525 = vmatpush1.msra.mxu0 %v468
        %526 = vmatprep.subr.mxu0 0.0
        %527 = vmatpush1.msra.mxu0 0.0
        %528 = vmatprep.subr.mxu0 0.0
        %529 = vmatpush1.msra.mxu0 0.0
        %530 = vmatprep.subr.mxu0 0.0
        %531 = vmatpush1.msra.mxu0 0.0
        %532 = vmatprep.subr.mxu0 0.0
        %533 = vmatpush1.msra.mxu0 0.0
        %534 = vmatprep.subr.mxu0 0.0
        %535 = vmatpush1.msra.mxu0 0.0
        %536 = vmatprep.subr.mxu0 0.0
        %537 = vmatpush1.msra.mxu0 0.0
        %538 = vmatprep.subr.mxu0 0.0
        %539 = vmatpush1.msra.mxu0 0.0
        %540 = vmatprep.subr.mxu0 0.0
        %541 = vmatpush1.msra.mxu0 0.0
        %542 = vmatprep.subr.mxu0 0.0
        %543 = vmatpush1.msra.mxu0 0.0
        %544 = vmatprep.subr.mxu0 0.0
        %545 = vmatpush1.msra.mxu0 0.0
        %546 = vmatprep.subr.mxu0 0.0
        %547 = vmatpush1.msra.mxu0 0.0
        %548 = vmatprep.subr.mxu0 0.0
        %549 = vmatpush1.msra.mxu0 0.0
        %550 = vmatprep.subr.mxu0 0.0
        %551 = vmatpush1.msra.mxu0 0.0
        %552 = vmatprep.subr.mxu0 0.0
        %553 = vmatpush1.msra.mxu0 0.0
        %554 = vmatprep.subr.mxu0 0.0
        %555 = vmatpush1.msra.mxu0 0.0
        %556 = vmatprep.subr.mxu0 0.0
        %557 = vmatpush1.msra.mxu0 0.0
        %558 = vmatprep.mubr.f32.mxu0 0.0
        %559 = vmatmul.mubr.f32.gmra.mrb[0].mxu0 %v407
        %v560 = vpop.f32.mrb[0].mxu0
        %v561 = vadd.f32 %v477, %v560
        %v562 = vpop.f32.mrb[0].mxu0
        %v563 = vadd.f32 %v481, %v562
        %564 = vdwg.mxu0
        %565 = vmatprep.subr.mxu0 %v411
        %566 = vmatpush1.msra.mxu0 %v410
        %567 = vmatprep.subr.mxu0 %v415
        %568 = vmatpush1.msra.mxu0 %v414
        %569 = vmatprep.subr.mxu0 %v419
        %570 = vmatpush1.msra.mxu0 %v418
        %571 = vmatprep.subr.mxu0 %v423
        %572 = vmatpush1.msra.mxu0 %v422
        %573 = vmatprep.subr.mxu0 %v427
        %574 = vmatpush1.msra.mxu0 %v426
        %575 = vmatprep.subr.mxu0 %v431
        %576 = vmatpush1.msra.mxu0 %v430
        %577 = vmatprep.subr.mxu0 %v435
        %578 = vmatpush1.msra.mxu0 %v434
        %579 = vmatprep.subr.mxu0 %v439
        %580 = vmatpush1.msra.mxu0 %v438
        %581 = vmatprep.subr.mxu0 %v443
        %582 = vmatpush1.msra.mxu0 %v442
        %583 = vmatprep.subr.mxu0 %v447
        %584 = vmatpush1.msra.mxu0 %v446
        %585 = vmatprep.subr.mxu0 %v451
        %586 = vmatpush1.msra.mxu0 %v450
        %587 = vmatprep.subr.mxu0 %v455
        %588 = vmatpush1.msra.mxu0 %v454
        %589 = vmatprep.subr.mxu0 %v459
        %590 = vmatpush1.msra.mxu0 %v458
        %591 = vmatprep.subr.mxu0 %v463
        %592 = vmatpush1.msra.mxu0 %v462
        %593 = vmatprep.subr.mxu0 %v467
        %594 = vmatpush1.msra.mxu0 %v466
        %595 = vmatprep.subr.mxu0 %v471
        %596 = vmatpush1.msra.mxu0 %v470
        %597 = vmatprep.subr.mxu0 0.0
        %598 = vmatpush1.msra.mxu0 0.0
        %599 = vmatprep.subr.mxu0 0.0
        %600 = vmatpush1.msra.mxu0 0.0
        %601 = vmatprep.subr.mxu0 0.0
        %602 = vmatpush1.msra.mxu0 0.0
        %603 = vmatprep.subr.mxu0 0.0
        %604 = vmatpush1.msra.mxu0 0.0
        %605 = vmatprep.subr.mxu0 0.0
        %606 = vmatpush1.msra.mxu0 0.0
        %607 = vmatprep.subr.mxu0 0.0
        %608 = vmatpush1.msra.mxu0 0.0
        %609 = vmatprep.subr.mxu0 0.0
        %610 = vmatpush1.msra.mxu0 0.0
        %611 = vmatprep.subr.mxu0 0.0
        %612 = vmatpush1.msra.mxu0 0.0
        %613 = vmatprep.subr.mxu0 0.0
        %614 = vmatpush1.msra.mxu0 0.0
        %615 = vmatprep.subr.mxu0 0.0
        %616 = vmatpush1.msra.mxu0 0.0
        %617 = vmatprep.subr.mxu0 0.0
        %618 = vmatpush1.msra.mxu0 0.0
        %619 = vmatprep.subr.mxu0 0.0
        %620 = vmatpush1.msra.mxu0 0.0
        %621 = vmatprep.subr.mxu0 0.0
        %622 = vmatpush1.msra.mxu0 0.0
        %623 = vmatprep.subr.mxu0 0.0
        %624 = vmatpush1.msra.mxu0 0.0
        %625 = vmatprep.subr.mxu0 0.0
        %626 = vmatpush1.msra.mxu0 0.0
        %627 = vmatprep.subr.mxu0 0.0
        %628 = vmatpush1.msra.mxu0 0.0
        %629 = vmatprep.mubr.f32.mxu0 0.0
        %630 = vmatmul.mubr.f32.gmra.mrb[0].mxu0 %v407
        %v631 = vpop.f32.mrb[0].mxu0
        %v632 = vadd.f32 %v485, %v631
        %v633 = vpop.f32.mrb[0].mxu0
        %v634 = vadd.f32 %v489, %v633
        %635 = vdwg.mxu0
        %v636 = vmul.f32 %v561, 0.5
        %v637 = vmul.f32 %v563, 0.5
        %v638 = vmul.f32 %v632, 0.5
        %v639 = vmul.f32 %v634, 0.5
        %v640 = vmul.f32 %v561, 0.70710677
        %v641 = vmul.f32 %v563, 0.70710677
        %v642 = vmul.f32 %v632, 0.70710677
        %v643 = vmul.f32 %v634, 0.70710677
        %v644 = verf.f32.pop %v640
        %v645 = verf.f32.pop %v641
        %v646 = verf.f32.pop %v642
        %v647 = verf.f32.pop %v643
        %v648 = vadd.f32 %v644, 1.0
        %v649 = vadd.f32 %v645, 1.0
        %v650 = vadd.f32 %v646, 1.0
        %v651 = vadd.f32 %v647, 1.0
        %v652 = vmul.f32 %v636, %v648
        %v653 = vmul.f32 %v637, %v649
        %v654 = vmul.f32 %v638, %v650
        %v655 = vmul.f32 %v639, %v651
        %v656 = vld [vmem:[#allocation3] sm:$0xff]
        %v657 = vld [vmem:[#allocation9] sm:$0xff]
        %v658 = vld [vmem:[#allocation9 + $0x8] sm:$0xff]
        %v659 = vld [vmem:[#allocation9 + $0x10] sm:$0xff]
        %v660 = vld [vmem:[#allocation9 + $0x18] sm:$0xff]
        %v661 = vld [vmem:[#allocation9 + $0x20] sm:$0xff]
        %v662 = vld [vmem:[#allocation9 + $0x28] sm:$0xff]
        %v663 = vld [vmem:[#allocation9 + $0x30] sm:$0xff]
        %v664 = vld [vmem:[#allocation9 + $0x38] sm:$0xff]
        %v665 = vld [vmem:[#allocation9 + $0x40] sm:$0xff]
        %v666 = vld [vmem:[#allocation9 + $0x48] sm:$0xff]
        %v667 = vld [vmem:[#allocation9 + $0x50] sm:$0xff]
        %v668 = vld [vmem:[#allocation9 + $0x58] sm:$0xff]
        %v669 = vld [vmem:[#allocation9 + $0x60] sm:$0xff]
        %v670 = vld [vmem:[#allocation9 + $0x68] sm:$0xff]
        %v671 = vld [vmem:[#allocation9 + $0x70] sm:$0xff]
        %v672 = vld [vmem:[#allocation9 + $0x78] sm:$0xff]
        %v673 = vld [vmem:[#allocation9 + $0x80] sm:$0xff]
        %v674 = vld [vmem:[#allocation9 + $0x88] sm:$0xff]
        %v675 = vld [vmem:[#allocation9 + $0x90] sm:$0xff]
        %v676 = vld [vmem:[#allocation9 + $0x98] sm:$0xff]
        %v677 = vld [vmem:[#allocation9 + $0xa0] sm:$0xff]
        %v678 = vld [vmem:[#allocation9 + $0xa8] sm:$0xff]
        %v679 = vld [vmem:[#allocation9 + $0xb0] sm:$0xff]
        %v680 = vld [vmem:[#allocation9 + $0xb8] sm:$0xff]
        %v681 = vld [vmem:[#allocation9 + $0xc0] sm:$0xff]
        %v682 = vld [vmem:[#allocation9 + $0xc8] sm:$0xff]
        %v683 = vld [vmem:[#allocation9 + $0xd0] sm:$0xff]
        %v684 = vld [vmem:[#allocation9 + $0xd8] sm:$0xff]
        %v685 = vld [vmem:[#allocation9 + $0xe0] sm:$0xff]
        %v686 = vld [vmem:[#allocation9 + $0xe8] sm:$0xff]
        %v687 = vld [vmem:[#allocation9 + $0xf0] sm:$0xff]
        %v688 = vld [vmem:[#allocation9 + $0xf8] sm:$0xff]
        %v689 = vld [vmem:[#allocation9 + $0x100] sm:$0xff]
        %v690 = vld [vmem:[#allocation9 + $0x108] sm:$0xff]
        %v691 = vld [vmem:[#allocation9 + $0x110] sm:$0xff]
        %v692 = vld [vmem:[#allocation9 + $0x118] sm:$0xff]
        %v693 = vld [vmem:[#allocation9 + $0x120] sm:$0xff]
        %v694 = vld [vmem:[#allocation9 + $0x128] sm:$0xff]
        %v695 = vld [vmem:[#allocation9 + $0x130] sm:$0xff]
        %v696 = vld [vmem:[#allocation9 + $0x138] sm:$0xff]
        %v697 = vld [vmem:[#allocation9 + $0x140] sm:$0xff]
        %v698 = vld [vmem:[#allocation9 + $0x148] sm:$0xff]
        %v699 = vld [vmem:[#allocation9 + $0x150] sm:$0xff]
        %v700 = vld [vmem:[#allocation9 + $0x158] sm:$0xff]
        %v701 = vld [vmem:[#allocation9 + $0x160] sm:$0xff]
        %v702 = vld [vmem:[#allocation9 + $0x168] sm:$0xff]
        %v703 = vld [vmem:[#allocation9 + $0x170] sm:$0xff]
        %v704 = vld [vmem:[#allocation9 + $0x178] sm:$0xff]
        %v705 = vld [vmem:[#allocation9 + $0x180] sm:$0xff]
        %v706 = vld [vmem:[#allocation9 + $0x188] sm:$0xff]
        %v707 = vld [vmem:[#allocation9 + $0x190] sm:$0xff]
        %v708 = vld [vmem:[#allocation9 + $0x198] sm:$0xff]
        %v709 = vld [vmem:[#allocation9 + $0x1a0] sm:$0xff]
        %v710 = vld [vmem:[#allocation9 + $0x1a8] sm:$0xff]
        %v711 = vld [vmem:[#allocation9 + $0x1b0] sm:$0xff]
        %v712 = vld [vmem:[#allocation9 + $0x1b8] sm:$0xff]
        %v713 = vld [vmem:[#allocation9 + $0x1c0] sm:$0xff]
        %v714 = vld [vmem:[#allocation9 + $0x1c8] sm:$0xff]
        %v715 = vld [vmem:[#allocation9 + $0x1d0] sm:$0xff]
        %v716 = vld [vmem:[#allocation9 + $0x1d8] sm:$0xff]
        %v717 = vld [vmem:[#allocation9 + $0x1e0] sm:$0xff]
        %v718 = vld [vmem:[#allocation9 + $0x1e8] sm:$0xff]
        %v719 = vld [vmem:[#allocation9 + $0x1f0] sm:$0xff]
        %v720 = vld [vmem:[#allocation9 + $0x1f8] sm:$0xff]
        %721 = vmatprep.subr.mxu0 0.0
        %722 = vmatpush1.msra.mxu0 %v657
        %723 = vmatprep.subr.mxu0 0.0
        %724 = vmatpush1.msra.mxu0 %v658
        %725 = vmatprep.subr.mxu0 0.0
        %726 = vmatpush1.msra.mxu0 %v659
        %727 = vmatprep.subr.mxu0 0.0
        %728 = vmatpush1.msra.mxu0 %v660
        %729 = vmatprep.subr.mxu0 0.0
        %730 = vmatpush1.msra.mxu0 %v661
        %731 = vmatprep.subr.mxu0 0.0
        %732 = vmatpush1.msra.mxu0 %v662
        %733 = vmatprep.subr.mxu0 0.0
        %734 = vmatpush1.msra.mxu0 %v663
        %735 = vmatprep.subr.mxu0 0.0
        %736 = vmatpush1.msra.mxu0 %v664
        %737 = vmatprep.subr.mxu0 0.0
        %738 = vmatpush1.msra.mxu0 %v665
        %739 = vmatprep.subr.mxu0 0.0
        %740 = vmatpush1.msra.mxu0 %v666
        %741 = vmatprep.subr.mxu0 0.0
        %742 = vmatpush1.msra.mxu0 %v667
        %743 = vmatprep.subr.mxu0 0.0
        %744 = vmatpush1.msra.mxu0 %v668
        %745 = vmatprep.subr.mxu0 0.0
        %746 = vmatpush1.msra.mxu0 %v669
        %747 = vmatprep.subr.mxu0 0.0
        %748 = vmatpush1.msra.mxu0 %v670
        %749 = vmatprep.subr.mxu0 0.0
        %750 = vmatpush1.msra.mxu0 %v671
        %751 = vmatprep.subr.mxu0 0.0
        %752 = vmatpush1.msra.mxu0 %v672
        %753 = vmatprep.subr.mxu0 0.0
        %754 = vmatpush1.msra.mxu0 %v673
        %755 = vmatprep.subr.mxu0 0.0
        %756 = vmatpush1.msra.mxu0 %v674
        %757 = vmatprep.subr.mxu0 0.0
        %758 = vmatpush1.msra.mxu0 %v675
        %759 = vmatprep.subr.mxu0 0.0
        %760 = vmatpush1.msra.mxu0 %v676
        %761 = vmatprep.subr.mxu0 0.0
        %762 = vmatpush1.msra.mxu0 %v677
        %763 = vmatprep.subr.mxu0 0.0
        %764 = vmatpush1.msra.mxu0 %v678
        %765 = vmatprep.subr.mxu0 0.0
        %766 = vmatpush1.msra.mxu0 %v679
        %767 = vmatprep.subr.mxu0 0.0
        %768 = vmatpush1.msra.mxu0 %v680
        %769 = vmatprep.subr.mxu0 0.0
        %770 = vmatpush1.msra.mxu0 %v681
        %771 = vmatprep.subr.mxu0 0.0
        %772 = vmatpush1.msra.mxu0 %v682
        %773 = vmatprep.subr.mxu0 0.0
        %774 = vmatpush1.msra.mxu0 %v683
        %775 = vmatprep.subr.mxu0 0.0
        %776 = vmatpush1.msra.mxu0 %v684
        %777 = vmatprep.subr.mxu0 0.0
        %778 = vmatpush1.msra.mxu0 %v685
        %779 = vmatprep.subr.mxu0 0.0
        %780 = vmatpush1.msra.mxu0 %v686
        %781 = vmatprep.subr.mxu0 0.0
        %782 = vmatpush1.msra.mxu0 %v687
        %783 = vmatprep.subr.mxu0 0.0
        %784 = vmatpush1.msra.mxu0 %v688
        %785 = vmatprep.mubr.f32.mxu0 %v653
        %786 = vmatmul.mubr.f32.gmra.mrb[0].mxu0 %v652
        %v787 = vpop.f32.mrb[0].mxu0
        %v788 = vadd.f32 0.0, %v787
        %v789 = vpop.f32.mrb[0].mxu0
        %790 = vdwg.mxu0
        %791 = vmatprep.subr.mxu0 0.0
        %792 = vmatpush1.msra.mxu0 %v689
        %793 = vmatprep.subr.mxu0 0.0
        %794 = vmatpush1.msra.mxu0 %v690
        %795 = vmatprep.subr.mxu0 0.0
        %796 = vmatpush1.msra.mxu0 %v691
        %797 = vmatprep.subr.mxu0 0.0
        %798 = vmatpush1.msra.mxu0 %v692
        %799 = vmatprep.subr.mxu0 0.0
        %800 = vmatpush1.msra.mxu0 %v693
        %801 = vmatprep.subr.mxu0 0.0
        %802 = vmatpush1.msra.mxu0 %v694
        %803 = vmatprep.subr.mxu0 0.0
        %804 = vmatpush1.msra.mxu0 %v695
        %805 = vmatprep.subr.mxu0 0.0
        %806 = vmatpush1.msra.mxu0 %v696
        %807 = vmatprep.subr.mxu0 0.0
        %808 = vmatpush1.msra.mxu0 %v697
        %809 = vmatprep.subr.mxu0 0.0
        %810 = vmatpush1.msra.mxu0 %v698
        %811 = vmatprep.subr.mxu0 0.0
        %812 = vmatpush1.msra.mxu0 %v699
        %813 = vmatprep.subr.mxu0 0.0
        %814 = vmatpush1.msra.mxu0 %v700
        %815 = vmatprep.subr.mxu0 0.0
        %816 = vmatpush1.msra.mxu0 %v701
        %817 = vmatprep.subr.mxu0 0.0
        %818 = vmatpush1.msra.mxu0 %v702
        %819 = vmatprep.subr.mxu0 0.0
        %820 = vmatpush1.msra.mxu0 %v703
        %821 = vmatprep.subr.mxu0 0.0
        %822 = vmatpush1.msra.mxu0 %v704
        %823 = vmatprep.subr.mxu0 0.0
        %824 = vmatpush1.msra.mxu0 %v705
        %825 = vmatprep.subr.mxu0 0.0
        %826 = vmatpush1.msra.mxu0 %v706
        %827 = vmatprep.subr.mxu0 0.0
        %828 = vmatpush1.msra.mxu0 %v707
        %829 = vmatprep.subr.mxu0 0.0
        %830 = vmatpush1.msra.mxu0 %v708
        %831 = vmatprep.subr.mxu0 0.0
        %832 = vmatpush1.msra.mxu0 %v709
        %833 = vmatprep.subr.mxu0 0.0
        %834 = vmatpush1.msra.mxu0 %v710
        %835 = vmatprep.subr.mxu0 0.0
        %836 = vmatpush1.msra.mxu0 %v711
        %837 = vmatprep.subr.mxu0 0.0
        %838 = vmatpush1.msra.mxu0 %v712
        %839 = vmatprep.subr.mxu0 0.0
        %840 = vmatpush1.msra.mxu0 %v713
        %841 = vmatprep.subr.mxu0 0.0
        %842 = vmatpush1.msra.mxu0 %v714
        %843 = vmatprep.subr.mxu0 0.0
        %844 = vmatpush1.msra.mxu0 %v715
        %845 = vmatprep.subr.mxu0 0.0
        %846 = vmatpush1.msra.mxu0 %v716
        %847 = vmatprep.subr.mxu0 0.0
        %848 = vmatpush1.msra.mxu0 %v717
        %849 = vmatprep.subr.mxu0 0.0
        %850 = vmatpush1.msra.mxu0 %v718
        %851 = vmatprep.subr.mxu0 0.0
        %852 = vmatpush1.msra.mxu0 %v719
        %853 = vmatprep.subr.mxu0 0.0
        %854 = vmatpush1.msra.mxu0 %v720
        %855 = vmatprep.mubr.f32.mxu0 %v655
        %856 = vmatmul.mubr.f32.gmra.mrb[0].mxu0 %v654
        %v857 = vpop.f32.mrb[0].mxu0
        %v858 = vadd.f32 %v788, %v857
        %v859 = vpop.f32.mrb[0].mxu0
        %860 = vdwg.mxu0
        %v861 = vadd.f32 %v656, %v858
        %862 = vst [vmem:[#allocation3] sm:$0xff] %v861
        // Predicated region
        $region65: #{tpu_custom_call.1} parent=47 // pred_check
          %p863 = pneg %p372
        $region66: #{tpu_custom_call.1} parent=47 // pred_check_branch
          %865 = sbr.rel (%p863) target = $region68
        $region67: #{tpu_custom_call.1} parent=47 // pred_region
          %v866 = vld [vmem:[#allocation3] sm:$0xff]
          %v867 = vld [vmem:[%s6] sm:$0x1]
          %v869 = vlaneseq
          %v870 = vshrl.u32 %v869, 7
          %v871 = vsub.s32 0, %v870
          %v872 = vrot.slane %v867, %v871
          %v874 = vadd.f32 %v866, %v872
          %875 = vst [vmem:[%s364] sm:$0xff] %v874
        $region68: #{tpu_custom_call.1} parent=47 // pred_fallthru
          _
        %s876 = sand.u32 %s212, 1
        %s877 = scalar_lea.sflag [#allocation6], %s876
        %s878 = sand.u32 %s212, 1
        %s879 = smul.addr %s878, 8
        %s880 = scalar_lea.vmem [#allocation10], %s879
        // Predicated region
        $region69: #{tpu_custom_call.1} parent=47 // pred_check
          %p881 = pneg %p222
        $region70: #{tpu_custom_call.1} parent=47 // pred_check_branch
          %883 = sbr.rel (%p881) target = $region72
        $region71: #{tpu_custom_call.1} parent=47 // pred_region
          %s885 = ssub.s32 128, 128
          %886 = vsyncadd %s877, %s885
          %s887 = smul.addr %s29, 128
          %s888 = scalar_lea.hbm %s7, %s887
          %s890 = sshll.u32 %s880, 4
          %s891 = int_to_ptr.vmem [resolvable:$true] %s890
          %893 = dma.vmem_to_hbm [thread:$0]  %s891, 128, %s888, %s877
        $region72: #{tpu_custom_call.1} parent=47 // pred_fallthru
          _
      $region48: #{tpu_custom_call.1} parent=5 // pred_fallthru
        _
      %p894 = scmp.le.s32.totalorder 2, %s20
      // Predicated region
      $region73: #{tpu_custom_call.1} parent=5 // pred_check
        %p895 = pneg %p894
      $region74: #{tpu_custom_call.1} parent=5 // pred_check_branch
        %897 = sbr.rel (%p895) target = $region76
      $region75: #{tpu_custom_call.1} parent=5 // pred_region
        %s898 = ssub.s32 %s20, 2
        // Predicated region
        $region77: #{tpu_custom_call.1} parent=75 // pred_check
          %p899 = pneg %p228
        $region78: #{tpu_custom_call.1} parent=75 // pred_check_branch
          %901 = sbr.rel (%p899) target = $region80
        $region79: #{tpu_custom_call.1} parent=75 // pred_region
          %s902 = sand.u32 %s213, 1
          %s903 = scalar_lea.sflag [#allocation6], %s902
          %s904 = sand.u32 %s213, 1
          %s905 = smul.addr %s904, 8
          %s906 = scalar_lea.vmem [#allocation10], %s905
          %907 = dma.done %s903, 128
        $region80: #{tpu_custom_call.1} parent=75 // pred_fallthru
          _
      $region76: #{tpu_custom_call.1} parent=5 // pred_fallthru
        _
    $region6: #{tpu_custom_call.1} parent=1 // loop_footer
      %s24 = sadd.s32 1, %s20
    $region7: #{tpu_custom_call.1} parent=1 // loop_footer_branch
      %19 = sbr.rel target = $region3
    $region8: #{tpu_custom_call.1} parent=1 // loop_exit
      _
    %908 = vsyncpa [#allocation5], 1
    %s909 = scalar_lea.sflag [#allocation5], 1
    %910 = vsyncpa %s909, 1
    %911 = vsyncpa [#allocation8], 1
    %912 = vsyncpa [#allocation6], 1
    %s913 = scalar_lea.sflag [#allocation6], 1
    %914 = vsyncpa %s913, 1

</llo_original>
